<compile_context>
chip_gen: v7x
topology: tpu7x:2x2x1
jax: 0.10.0
libtpu: 0.0.40
codegen_flags: <defaults>
</compile_context>

<pallas_src>
import functools

import jax
import jax.numpy as jnp
from jax.experimental import pallas as pl
from jax.experimental.pallas import tpu as pltpu


def _make_kernel(d_in, d_hidden, d_code, bt):
    def kernel(x_ref,
               w1_ref, b1_ref, w2_ref, b2_ref,   # encoder
               w3_ref, b3_ref, w4_ref, b4_ref,   # decoder
               out_ref):
        x = x_ref[...]                            # [d_in, bt]  (batch in lanes)

        def fma_layer(w_ref, b_ref, a, k):
            # y = W @ a + b, unrolled as k VPU broadcast-FMAs.
            # bias folded in as the accumulator init (lane-broadcast).
            w = w_ref[...]                        # [rows, k]
            acc = jnp.broadcast_to(b_ref[...], (w.shape[0], bt)).astype(jnp.float32)
            for i in range(k):
                acc = acc + w[:, i:i + 1] * a[i:i + 1, :]
            return acc

        # Encoder: Linear(d_in, hidden) -> ReLU -> Linear(hidden, code)
        h1 = jnp.maximum(fma_layer(w1_ref, b1_ref, x, d_in), 0.0)
        z = fma_layer(w2_ref, b2_ref, h1, d_hidden)
        # Decoder: Linear(code, hidden) -> ReLU -> Linear(hidden, d_in)
        h2 = jnp.maximum(fma_layer(w3_ref, b3_ref, z, d_code), 0.0)
        out = fma_layer(w4_ref, b4_ref, h2, d_hidden)

        # One lane-dense output slab: rows [0:d_in) = out, rows [d_in:) = z.
        out_ref[0:d_in, :] = out.astype(out_ref.dtype)
        out_ref[d_in:d_in + d_code, :] = z.astype(out_ref.dtype)

    return kernel


def simple_autoencoder_forward(x, params, *, batch_tile=None):
    """x: [B, input_dim] float32.
    params: PyTorch-layout weights ([out, in]) and biases ([out, 1]).
    Returns (out [B, input_dim], z [B, code_dim])."""
    B, d_in = x.shape
    w1, b1, w2, b2, w3, b3, w4, b4 = (
        params["w1"], params["b1"], params["w2"], params["b2"],
        params["w3"], params["b3"], params["w4"], params["b4"],
    )
    d_hidden = w1.shape[0]
    d_code = w2.shape[0]
    d_slab = d_in + d_code

    LANE = 128
    if batch_tile is None:
        # Lane-dense tiles; large enough to amortize ~0.35 us/step overhead,
        # small enough that 2x(in + out) double-buffers are << any VMEM limit.
        batch_tile = min(8192, max(LANE, pl.next_power_of_2(pl.cdiv(B, 2))))
    bt = max(LANE, (batch_tile // LANE) * LANE)          # bt % 128 == 0

    n_tiles = max(2, pl.cdiv(B, bt))                     # >= 2 grid steps (v7x megacore)
    B_pad = n_tiles * bt

    # Batch-in-lanes relayout: [B, d_in] -> [d_in, B_pad] (zero padded).
    x_t = jnp.pad(x.T, ((0, 0), (0, B_pad - B)))

    kernel = _make_kernel(d_in, d_hidden, d_code, bt)
    bcast = lambda i: (0, 0)   # weights/biases: constant index map -> stay VMEM-resident

    slab = pl.pallas_call(
        kernel,
        out_shape=jax.ShapeDtypeStruct((d_slab, B_pad), x.dtype),
        grid=(n_tiles,),
        in_specs=[
            pl.BlockSpec((d_in, bt), lambda i: (0, i)),   # x   (lane-dense batch tile)
            pl.BlockSpec((d_hidden, d_in), bcast),        # w1  [hidden, d_in]
            pl.BlockSpec((d_hidden, 1), bcast),           # b1  [hidden, 1]
            pl.BlockSpec((d_code, d_hidden), bcast),      # w2  [code, hidden]
            pl.BlockSpec((d_code, 1), bcast),             # b2  [code, 1]
            pl.BlockSpec((d_hidden, d_code), bcast),      # w3  [hidden, code]
            pl.BlockSpec((d_hidden, 1), bcast),           # b3  [hidden, 1]
            pl.BlockSpec((d_in, d_hidden), bcast),        # w4  [d_in, hidden]
            pl.BlockSpec((d_in, 1), bcast),               # b4  [d_in, 1]
        ],
        out_specs=pl.BlockSpec((d_slab, bt), lambda i: (0, i)),
        compiler_params=pltpu.CompilerParams(
            dimension_semantics=("parallel",)),
    )(x_t, w1, b1, w2, b2, w3, b3, w4, b4)

    out = slab[:d_in, :B].T
    z = slab[d_in:d_in + d_code, :B].T
    return out, z


def init_params(key, input_dim=2, hidden_dim=16, code_dim=2, dtype=jnp.float32):
    """PyTorch-Linear-style init: W [out, in], b [out, 1], U(-1/sqrt(fan_in), +1/sqrt(fan_in))."""
    def linear(k, fan_in, fan_out):
        kw, kb = jax.random.split(k)
        bound = 1.0 / jnp.sqrt(jnp.asarray(fan_in, dtype))
        w = jax.random.uniform(kw, (fan_out, fan_in), dtype, -bound, bound)
        b = jax.random.uniform(kb, (fan_out, 1), dtype, -bound, bound)
        return w, b

    k1, k2, k3, k4 = jax.random.split(key, 4)
    w1, b1 = linear(k1, input_dim, hidden_dim)   # encoder.0
    w2, b2 = linear(k2, hidden_dim, code_dim)    # encoder.2
    w3, b3 = linear(k3, code_dim, hidden_dim)    # decoder.0
    w4, b4 = linear(k4, hidden_dim, input_dim)   # decoder.2
    return dict(w1=w1, b1=b1, w2=w2, b2=b2, w3=w3, b3=b3, w4=w4, b4=b4)


def reference_forward(x, p):
    """Pure-JAX reference (same math as the PyTorch module)."""
    h1 = jnp.maximum(x @ p["w1"].T + p["b1"][:, 0], 0.0)
    z = h1 @ p["w2"].T + p["b2"][:, 0]
    h2 = jnp.maximum(z @ p["w3"].T + p["b3"][:, 0], 0.0)
    out = h2 @ p["w4"].T + p["b4"][:, 0]
    return out, z


if __name__ == "__main__":
    key = jax.random.PRNGKey(0)
    kx, kp = jax.random.split(key)

    B, INPUT_DIM, HIDDEN_DIM, CODE_DIM = 8, 2, 16, 2
    x = jax.random.normal(kx, (B, INPUT_DIM), jnp.float32)
    params = init_params(kp, INPUT_DIM, HIDDEN_DIM, CODE_DIM)

    out, z = simple_autoencoder_forward(x, params)
    out, z = jax.block_until_ready((out, z))

    out_ref, z_ref = reference_forward(x, params)
    assert out.shape == (B, INPUT_DIM) and z.shape == (B, CODE_DIM)
    assert jnp.allclose(out, out_ref, atol=1e-5, rtol=1e-5)
    assert jnp.allclose(z, z_ref, atol=1e-5, rtol=1e-5)

    print("KERNEL_OK")
</pallas_src>

<mosaic_0001>
module attributes {stable_mosaic.version = 11 : i64} {
  func.func @kernel(%arg0: i32, %arg1: memref<2x128xf32, #tpu.memory_space<vmem>>, %arg2: memref<16x2xf32, #tpu.memory_space<vmem>>, %arg3: memref<16x1xf32, #tpu.memory_space<vmem>>, %arg4: memref<2x16xf32, #tpu.memory_space<vmem>>, %arg5: memref<2x1xf32, #tpu.memory_space<vmem>>, %arg6: memref<16x2xf32, #tpu.memory_space<vmem>>, %arg7: memref<16x1xf32, #tpu.memory_space<vmem>>, %arg8: memref<2x16xf32, #tpu.memory_space<vmem>>, %arg9: memref<2x1xf32, #tpu.memory_space<vmem>>, %arg10: memref<4x128xf32, #tpu.memory_space<vmem>>) attributes {dimension_semantics = [#tpu.dimension_semantics<parallel>], iteration_bounds = array<i64: 2>, scalar_prefetch = 0 : i64, scratch_operands = 0 : i64, tpu.core_type = #tpu.core_type<tc>, window_params = [{transform_indices = @transform_0, window_bounds = array<i64: 2, 128>}, {pipeline_mode = #tpu.pipeline_mode<synchronous>, transform_indices = @transform_1, window_bounds = array<i64: 16, 2>}, {pipeline_mode = #tpu.pipeline_mode<synchronous>, transform_indices = @transform_2, window_bounds = array<i64: 16, 1>}, {pipeline_mode = #tpu.pipeline_mode<synchronous>, transform_indices = @transform_3, window_bounds = array<i64: 2, 16>}, {pipeline_mode = #tpu.pipeline_mode<synchronous>, transform_indices = @transform_4, window_bounds = array<i64: 2, 1>}, {pipeline_mode = #tpu.pipeline_mode<synchronous>, transform_indices = @transform_5, window_bounds = array<i64: 16, 2>}, {pipeline_mode = #tpu.pipeline_mode<synchronous>, transform_indices = @transform_6, window_bounds = array<i64: 16, 1>}, {pipeline_mode = #tpu.pipeline_mode<synchronous>, transform_indices = @transform_7, window_bounds = array<i64: 2, 16>}, {pipeline_mode = #tpu.pipeline_mode<synchronous>, transform_indices = @transform_8, window_bounds = array<i64: 2, 1>}, {transform_indices = @transform_9, window_bounds = array<i64: 4, 128>}]} {
    %c0 = arith.constant 0 : index
    %c0_0 = arith.constant 0 : index
    %0 = vector.load %arg1[%c0, %c0_0] : memref<2x128xf32, #tpu.memory_space<vmem>>, vector<2x128xf32>
    %c0_1 = arith.constant 0 : index
    %c0_2 = arith.constant 0 : index
    %1 = vector.load %arg2[%c0_1, %c0_2] : memref<16x2xf32, #tpu.memory_space<vmem>>, vector<16x2xf32>
    %c0_3 = arith.constant 0 : index
    %c0_4 = arith.constant 0 : index
    %2 = vector.load %arg3[%c0_3, %c0_4] : memref<16x1xf32, #tpu.memory_space<vmem>>, vector<16x1xf32>
    %3 = vector.shape_cast %2 : vector<16x1xf32> to vector<16x1xf32>
    %4 = vector.broadcast %3 : vector<16x1xf32> to vector<16x128xf32>
    %5 = vector.extract_strided_slice %1 {offsets = [0, 0], sizes = [16, 1], strides = [1, 1]} : vector<16x2xf32> to vector<16x1xf32>
    %6 = vector.extract_strided_slice %0 {offsets = [0, 0], sizes = [1, 128], strides = [1, 1]} : vector<2x128xf32> to vector<1x128xf32>
    %7 = vector.broadcast %5 : vector<16x1xf32> to vector<16x128xf32>
    %8 = vector.broadcast %6 : vector<1x128xf32> to vector<16x128xf32>
    %9 = arith.mulf %7, %8 : vector<16x128xf32>
    %10 = arith.addf %4, %9 : vector<16x128xf32>
    %11 = vector.extract_strided_slice %1 {offsets = [0, 1], sizes = [16, 1], strides = [1, 1]} : vector<16x2xf32> to vector<16x1xf32>
    %12 = vector.extract_strided_slice %0 {offsets = [1, 0], sizes = [1, 128], strides = [1, 1]} : vector<2x128xf32> to vector<1x128xf32>
    %13 = vector.broadcast %11 : vector<16x1xf32> to vector<16x128xf32>
    %14 = vector.broadcast %12 : vector<1x128xf32> to vector<16x128xf32>
    %15 = arith.mulf %13, %14 : vector<16x128xf32>
    %16 = arith.addf %10, %15 : vector<16x128xf32>
    %cst = arith.constant 0.000000e+00 : f32
    %17 = vector.broadcast %cst : f32 to vector<16x128xf32>
    %18 = arith.maximumf %16, %17 : vector<16x128xf32>
    %c0_5 = arith.constant 0 : index
    %c0_6 = arith.constant 0 : index
    %19 = vector.load %arg4[%c0_5, %c0_6] : memref<2x16xf32, #tpu.memory_space<vmem>>, vector<2x16xf32>
    %c0_7 = arith.constant 0 : index
    %c0_8 = arith.constant 0 : index
    %20 = vector.load %arg5[%c0_7, %c0_8] : memref<2x1xf32, #tpu.memory_space<vmem>>, vector<2x1xf32>
    %21 = vector.shape_cast %20 : vector<2x1xf32> to vector<2x1xf32>
    %22 = vector.broadcast %21 : vector<2x1xf32> to vector<2x128xf32>
    %23 = vector.extract_strided_slice %19 {offsets = [0, 0], sizes = [2, 1], strides = [1, 1]} : vector<2x16xf32> to vector<2x1xf32>
    %24 = vector.extract_strided_slice %18 {offsets = [0, 0], sizes = [1, 128], strides = [1, 1]} : vector<16x128xf32> to vector<1x128xf32>
    %25 = vector.broadcast %23 : vector<2x1xf32> to vector<2x128xf32>
    %26 = vector.broadcast %24 : vector<1x128xf32> to vector<2x128xf32>
    %27 = arith.mulf %25, %26 : vector<2x128xf32>
    %28 = arith.addf %22, %27 : vector<2x128xf32>
    %29 = vector.extract_strided_slice %19 {offsets = [0, 1], sizes = [2, 1], strides = [1, 1]} : vector<2x16xf32> to vector<2x1xf32>
    %30 = vector.extract_strided_slice %18 {offsets = [1, 0], sizes = [1, 128], strides = [1, 1]} : vector<16x128xf32> to vector<1x128xf32>
    %31 = vector.broadcast %29 : vector<2x1xf32> to vector<2x128xf32>
    %32 = vector.broadcast %30 : vector<1x128xf32> to vector<2x128xf32>
    %33 = arith.mulf %31, %32 : vector<2x128xf32>
    %34 = arith.addf %28, %33 : vector<2x128xf32>
    %35 = vector.extract_strided_slice %19 {offsets = [0, 2], sizes = [2, 1], strides = [1, 1]} : vector<2x16xf32> to vector<2x1xf32>
    %36 = vector.extract_strided_slice %18 {offsets = [2, 0], sizes = [1, 128], strides = [1, 1]} : vector<16x128xf32> to vector<1x128xf32>
    %37 = vector.broadcast %35 : vector<2x1xf32> to vector<2x128xf32>
    %38 = vector.broadcast %36 : vector<1x128xf32> to vector<2x128xf32>
    %39 = arith.mulf %37, %38 : vector<2x128xf32>
    %40 = arith.addf %34, %39 : vector<2x128xf32>
    %41 = vector.extract_strided_slice %19 {offsets = [0, 3], sizes = [2, 1], strides = [1, 1]} : vector<2x16xf32> to vector<2x1xf32>
    %42 = vector.extract_strided_slice %18 {offsets = [3, 0], sizes = [1, 128], strides = [1, 1]} : vector<16x128xf32> to vector<1x128xf32>
    %43 = vector.broadcast %41 : vector<2x1xf32> to vector<2x128xf32>
    %44 = vector.broadcast %42 : vector<1x128xf32> to vector<2x128xf32>
    %45 = arith.mulf %43, %44 : vector<2x128xf32>
    %46 = arith.addf %40, %45 : vector<2x128xf32>
    %47 = vector.extract_strided_slice %19 {offsets = [0, 4], sizes = [2, 1], strides = [1, 1]} : vector<2x16xf32> to vector<2x1xf32>
    %48 = vector.extract_strided_slice %18 {offsets = [4, 0], sizes = [1, 128], strides = [1, 1]} : vector<16x128xf32> to vector<1x128xf32>
    %49 = vector.broadcast %47 : vector<2x1xf32> to vector<2x128xf32>
    %50 = vector.broadcast %48 : vector<1x128xf32> to vector<2x128xf32>
    %51 = arith.mulf %49, %50 : vector<2x128xf32>
    %52 = arith.addf %46, %51 : vector<2x128xf32>
    %53 = vector.extract_strided_slice %19 {offsets = [0, 5], sizes = [2, 1], strides = [1, 1]} : vector<2x16xf32> to vector<2x1xf32>
    %54 = vector.extract_strided_slice %18 {offsets = [5, 0], sizes = [1, 128], strides = [1, 1]} : vector<16x128xf32> to vector<1x128xf32>
    %55 = vector.broadcast %53 : vector<2x1xf32> to vector<2x128xf32>
    %56 = vector.broadcast %54 : vector<1x128xf32> to vector<2x128xf32>
    %57 = arith.mulf %55, %56 : vector<2x128xf32>
    %58 = arith.addf %52, %57 : vector<2x128xf32>
    %59 = vector.extract_strided_slice %19 {offsets = [0, 6], sizes = [2, 1], strides = [1, 1]} : vector<2x16xf32> to vector<2x1xf32>
    %60 = vector.extract_strided_slice %18 {offsets = [6, 0], sizes = [1, 128], strides = [1, 1]} : vector<16x128xf32> to vector<1x128xf32>
    %61 = vector.broadcast %59 : vector<2x1xf32> to vector<2x128xf32>
    %62 = vector.broadcast %60 : vector<1x128xf32> to vector<2x128xf32>
    %63 = arith.mulf %61, %62 : vector<2x128xf32>
    %64 = arith.addf %58, %63 : vector<2x128xf32>
    %65 = vector.extract_strided_slice %19 {offsets = [0, 7], sizes = [2, 1], strides = [1, 1]} : vector<2x16xf32> to vector<2x1xf32>
    %66 = vector.extract_strided_slice %18 {offsets = [7, 0], sizes = [1, 128], strides = [1, 1]} : vector<16x128xf32> to vector<1x128xf32>
    %67 = vector.broadcast %65 : vector<2x1xf32> to vector<2x128xf32>
    %68 = vector.broadcast %66 : vector<1x128xf32> to vector<2x128xf32>
    %69 = arith.mulf %67, %68 : vector<2x128xf32>
    %70 = arith.addf %64, %69 : vector<2x128xf32>
    %71 = vector.extract_strided_slice %19 {offsets = [0, 8], sizes = [2, 1], strides = [1, 1]} : vector<2x16xf32> to vector<2x1xf32>
    %72 = vector.extract_strided_slice %18 {offsets = [8, 0], sizes = [1, 128], strides = [1, 1]} : vector<16x128xf32> to vector<1x128xf32>
    %73 = vector.broadcast %71 : vector<2x1xf32> to vector<2x128xf32>
    %74 = vector.broadcast %72 : vector<1x128xf32> to vector<2x128xf32>
    %75 = arith.mulf %73, %74 : vector<2x128xf32>
    %76 = arith.addf %70, %75 : vector<2x128xf32>
    %77 = vector.extract_strided_slice %19 {offsets = [0, 9], sizes = [2, 1], strides = [1, 1]} : vector<2x16xf32> to vector<2x1xf32>
    %78 = vector.extract_strided_slice %18 {offsets = [9, 0], sizes = [1, 128], strides = [1, 1]} : vector<16x128xf32> to vector<1x128xf32>
    %79 = vector.broadcast %77 : vector<2x1xf32> to vector<2x128xf32>
    %80 = vector.broadcast %78 : vector<1x128xf32> to vector<2x128xf32>
    %81 = arith.mulf %79, %80 : vector<2x128xf32>
    %82 = arith.addf %76, %81 : vector<2x128xf32>
    %83 = vector.extract_strided_slice %19 {offsets = [0, 10], sizes = [2, 1], strides = [1, 1]} : vector<2x16xf32> to vector<2x1xf32>
    %84 = vector.extract_strided_slice %18 {offsets = [10, 0], sizes = [1, 128], strides = [1, 1]} : vector<16x128xf32> to vector<1x128xf32>
    %85 = vector.broadcast %83 : vector<2x1xf32> to vector<2x128xf32>
    %86 = vector.broadcast %84 : vector<1x128xf32> to vector<2x128xf32>
    %87 = arith.mulf %85, %86 : vector<2x128xf32>
    %88 = arith.addf %82, %87 : vector<2x128xf32>
    %89 = vector.extract_strided_slice %19 {offsets = [0, 11], sizes = [2, 1], strides = [1, 1]} : vector<2x16xf32> to vector<2x1xf32>
    %90 = vector.extract_strided_slice %18 {offsets = [11, 0], sizes = [1, 128], strides = [1, 1]} : vector<16x128xf32> to vector<1x128xf32>
    %91 = vector.broadcast %89 : vector<2x1xf32> to vector<2x128xf32>
    %92 = vector.broadcast %90 : vector<1x128xf32> to vector<2x128xf32>
    %93 = arith.mulf %91, %92 : vector<2x128xf32>
    %94 = arith.addf %88, %93 : vector<2x128xf32>
    %95 = vector.extract_strided_slice %19 {offsets = [0, 12], sizes = [2, 1], strides = [1, 1]} : vector<2x16xf32> to vector<2x1xf32>
    %96 = vector.extract_strided_slice %18 {offsets = [12, 0], sizes = [1, 128], strides = [1, 1]} : vector<16x128xf32> to vector<1x128xf32>
    %97 = vector.broadcast %95 : vector<2x1xf32> to vector<2x128xf32>
    %98 = vector.broadcast %96 : vector<1x128xf32> to vector<2x128xf32>
    %99 = arith.mulf %97, %98 : vector<2x128xf32>
    %100 = arith.addf %94, %99 : vector<2x128xf32>
    %101 = vector.extract_strided_slice %19 {offsets = [0, 13], sizes = [2, 1], strides = [1, 1]} : vector<2x16xf32> to vector<2x1xf32>
    %102 = vector.extract_strided_slice %18 {offsets = [13, 0], sizes = [1, 128], strides = [1, 1]} : vector<16x128xf32> to vector<1x128xf32>
    %103 = vector.broadcast %101 : vector<2x1xf32> to vector<2x128xf32>
    %104 = vector.broadcast %102 : vector<1x128xf32> to vector<2x128xf32>
    %105 = arith.mulf %103, %104 : vector<2x128xf32>
    %106 = arith.addf %100, %105 : vector<2x128xf32>
    %107 = vector.extract_strided_slice %19 {offsets = [0, 14], sizes = [2, 1], strides = [1, 1]} : vector<2x16xf32> to vector<2x1xf32>
    %108 = vector.extract_strided_slice %18 {offsets = [14, 0], sizes = [1, 128], strides = [1, 1]} : vector<16x128xf32> to vector<1x128xf32>
    %109 = vector.broadcast %107 : vector<2x1xf32> to vector<2x128xf32>
    %110 = vector.broadcast %108 : vector<1x128xf32> to vector<2x128xf32>
    %111 = arith.mulf %109, %110 : vector<2x128xf32>
    %112 = arith.addf %106, %111 : vector<2x128xf32>
    %113 = vector.extract_strided_slice %19 {offsets = [0, 15], sizes = [2, 1], strides = [1, 1]} : vector<2x16xf32> to vector<2x1xf32>
    %114 = vector.extract_strided_slice %18 {offsets = [15, 0], sizes = [1, 128], strides = [1, 1]} : vector<16x128xf32> to vector<1x128xf32>
    %115 = vector.broadcast %113 : vector<2x1xf32> to vector<2x128xf32>
    %116 = vector.broadcast %114 : vector<1x128xf32> to vector<2x128xf32>
    %117 = arith.mulf %115, %116 : vector<2x128xf32>
    %118 = arith.addf %112, %117 : vector<2x128xf32>
    %c0_9 = arith.constant 0 : index
    %c0_10 = arith.constant 0 : index
    %119 = vector.load %arg6[%c0_9, %c0_10] : memref<16x2xf32, #tpu.memory_space<vmem>>, vector<16x2xf32>
    %c0_11 = arith.constant 0 : index
    %c0_12 = arith.constant 0 : index
    %120 = vector.load %arg7[%c0_11, %c0_12] : memref<16x1xf32, #tpu.memory_space<vmem>>, vector<16x1xf32>
    %121 = vector.shape_cast %120 : vector<16x1xf32> to vector<16x1xf32>
    %122 = vector.broadcast %121 : vector<16x1xf32> to vector<16x128xf32>
    %123 = vector.extract_strided_slice %119 {offsets = [0, 0], sizes = [16, 1], strides = [1, 1]} : vector<16x2xf32> to vector<16x1xf32>
    %124 = vector.extract_strided_slice %118 {offsets = [0, 0], sizes = [1, 128], strides = [1, 1]} : vector<2x128xf32> to vector<1x128xf32>
    %125 = vector.broadcast %123 : vector<16x1xf32> to vector<16x128xf32>
    %126 = vector.broadcast %124 : vector<1x128xf32> to vector<16x128xf32>
    %127 = arith.mulf %125, %126 : vector<16x128xf32>
    %128 = arith.addf %122, %127 : vector<16x128xf32>
    %129 = vector.extract_strided_slice %119 {offsets = [0, 1], sizes = [16, 1], strides = [1, 1]} : vector<16x2xf32> to vector<16x1xf32>
    %130 = vector.extract_strided_slice %118 {offsets = [1, 0], sizes = [1, 128], strides = [1, 1]} : vector<2x128xf32> to vector<1x128xf32>
    %131 = vector.broadcast %129 : vector<16x1xf32> to vector<16x128xf32>
    %132 = vector.broadcast %130 : vector<1x128xf32> to vector<16x128xf32>
    %133 = arith.mulf %131, %132 : vector<16x128xf32>
    %134 = arith.addf %128, %133 : vector<16x128xf32>
    %cst_13 = arith.constant 0.000000e+00 : f32
    %135 = vector.broadcast %cst_13 : f32 to vector<16x128xf32>
    %136 = arith.maximumf %134, %135 : vector<16x128xf32>
    %c0_14 = arith.constant 0 : index
    %c0_15 = arith.constant 0 : index
    %137 = vector.load %arg8[%c0_14, %c0_15] : memref<2x16xf32, #tpu.memory_space<vmem>>, vector<2x16xf32>
    %c0_16 = arith.constant 0 : index
    %c0_17 = arith.constant 0 : index
    %138 = vector.load %arg9[%c0_16, %c0_17] : memref<2x1xf32, #tpu.memory_space<vmem>>, vector<2x1xf32>
    %139 = vector.shape_cast %138 : vector<2x1xf32> to vector<2x1xf32>
    %140 = vector.broadcast %139 : vector<2x1xf32> to vector<2x128xf32>
    %141 = vector.extract_strided_slice %137 {offsets = [0, 0], sizes = [2, 1], strides = [1, 1]} : vector<2x16xf32> to vector<2x1xf32>
    %142 = vector.extract_strided_slice %136 {offsets = [0, 0], sizes = [1, 128], strides = [1, 1]} : vector<16x128xf32> to vector<1x128xf32>
    %143 = vector.broadcast %141 : vector<2x1xf32> to vector<2x128xf32>
    %144 = vector.broadcast %142 : vector<1x128xf32> to vector<2x128xf32>
    %145 = arith.mulf %143, %144 : vector<2x128xf32>
    %146 = arith.addf %140, %145 : vector<2x128xf32>
    %147 = vector.extract_strided_slice %137 {offsets = [0, 1], sizes = [2, 1], strides = [1, 1]} : vector<2x16xf32> to vector<2x1xf32>
    %148 = vector.extract_strided_slice %136 {offsets = [1, 0], sizes = [1, 128], strides = [1, 1]} : vector<16x128xf32> to vector<1x128xf32>
    %149 = vector.broadcast %147 : vector<2x1xf32> to vector<2x128xf32>
    %150 = vector.broadcast %148 : vector<1x128xf32> to vector<2x128xf32>
    %151 = arith.mulf %149, %150 : vector<2x128xf32>
    %152 = arith.addf %146, %151 : vector<2x128xf32>
    %153 = vector.extract_strided_slice %137 {offsets = [0, 2], sizes = [2, 1], strides = [1, 1]} : vector<2x16xf32> to vector<2x1xf32>
    %154 = vector.extract_strided_slice %136 {offsets = [2, 0], sizes = [1, 128], strides = [1, 1]} : vector<16x128xf32> to vector<1x128xf32>
    %155 = vector.broadcast %153 : vector<2x1xf32> to vector<2x128xf32>
    %156 = vector.broadcast %154 : vector<1x128xf32> to vector<2x128xf32>
    %157 = arith.mulf %155, %156 : vector<2x128xf32>
    %158 = arith.addf %152, %157 : vector<2x128xf32>
    %159 = vector.extract_strided_slice %137 {offsets = [0, 3], sizes = [2, 1], strides = [1, 1]} : vector<2x16xf32> to vector<2x1xf32>
    %160 = vector.extract_strided_slice %136 {offsets = [3, 0], sizes = [1, 128], strides = [1, 1]} : vector<16x128xf32> to vector<1x128xf32>
    %161 = vector.broadcast %159 : vector<2x1xf32> to vector<2x128xf32>
    %162 = vector.broadcast %160 : vector<1x128xf32> to vector<2x128xf32>
    %163 = arith.mulf %161, %162 : vector<2x128xf32>
    %164 = arith.addf %158, %163 : vector<2x128xf32>
    %165 = vector.extract_strided_slice %137 {offsets = [0, 4], sizes = [2, 1], strides = [1, 1]} : vector<2x16xf32> to vector<2x1xf32>
    %166 = vector.extract_strided_slice %136 {offsets = [4, 0], sizes = [1, 128], strides = [1, 1]} : vector<16x128xf32> to vector<1x128xf32>
    %167 = vector.broadcast %165 : vector<2x1xf32> to vector<2x128xf32>
    %168 = vector.broadcast %166 : vector<1x128xf32> to vector<2x128xf32>
    %169 = arith.mulf %167, %168 : vector<2x128xf32>
    %170 = arith.addf %164, %169 : vector<2x128xf32>
    %171 = vector.extract_strided_slice %137 {offsets = [0, 5], sizes = [2, 1], strides = [1, 1]} : vector<2x16xf32> to vector<2x1xf32>
    %172 = vector.extract_strided_slice %136 {offsets = [5, 0], sizes = [1, 128], strides = [1, 1]} : vector<16x128xf32> to vector<1x128xf32>
    %173 = vector.broadcast %171 : vector<2x1xf32> to vector<2x128xf32>
    %174 = vector.broadcast %172 : vector<1x128xf32> to vector<2x128xf32>
    %175 = arith.mulf %173, %174 : vector<2x128xf32>
    %176 = arith.addf %170, %175 : vector<2x128xf32>
    %177 = vector.extract_strided_slice %137 {offsets = [0, 6], sizes = [2, 1], strides = [1, 1]} : vector<2x16xf32> to vector<2x1xf32>
    %178 = vector.extract_strided_slice %136 {offsets = [6, 0], sizes = [1, 128], strides = [1, 1]} : vector<16x128xf32> to vector<1x128xf32>
    %179 = vector.broadcast %177 : vector<2x1xf32> to vector<2x128xf32>
    %180 = vector.broadcast %178 : vector<1x128xf32> to vector<2x128xf32>
    %181 = arith.mulf %179, %180 : vector<2x128xf32>
    %182 = arith.addf %176, %181 : vector<2x128xf32>
    %183 = vector.extract_strided_slice %137 {offsets = [0, 7], sizes = [2, 1], strides = [1, 1]} : vector<2x16xf32> to vector<2x1xf32>
    %184 = vector.extract_strided_slice %136 {offsets = [7, 0], sizes = [1, 128], strides = [1, 1]} : vector<16x128xf32> to vector<1x128xf32>
    %185 = vector.broadcast %183 : vector<2x1xf32> to vector<2x128xf32>
    %186 = vector.broadcast %184 : vector<1x128xf32> to vector<2x128xf32>
    %187 = arith.mulf %185, %186 : vector<2x128xf32>
    %188 = arith.addf %182, %187 : vector<2x128xf32>
    %189 = vector.extract_strided_slice %137 {offsets = [0, 8], sizes = [2, 1], strides = [1, 1]} : vector<2x16xf32> to vector<2x1xf32>
    %190 = vector.extract_strided_slice %136 {offsets = [8, 0], sizes = [1, 128], strides = [1, 1]} : vector<16x128xf32> to vector<1x128xf32>
    %191 = vector.broadcast %189 : vector<2x1xf32> to vector<2x128xf32>
    %192 = vector.broadcast %190 : vector<1x128xf32> to vector<2x128xf32>
    %193 = arith.mulf %191, %192 : vector<2x128xf32>
    %194 = arith.addf %188, %193 : vector<2x128xf32>
    %195 = vector.extract_strided_slice %137 {offsets = [0, 9], sizes = [2, 1], strides = [1, 1]} : vector<2x16xf32> to vector<2x1xf32>
    %196 = vector.extract_strided_slice %136 {offsets = [9, 0], sizes = [1, 128], strides = [1, 1]} : vector<16x128xf32> to vector<1x128xf32>
    %197 = vector.broadcast %195 : vector<2x1xf32> to vector<2x128xf32>
    %198 = vector.broadcast %196 : vector<1x128xf32> to vector<2x128xf32>
    %199 = arith.mulf %197, %198 : vector<2x128xf32>
    %200 = arith.addf %194, %199 : vector<2x128xf32>
    %201 = vector.extract_strided_slice %137 {offsets = [0, 10], sizes = [2, 1], strides = [1, 1]} : vector<2x16xf32> to vector<2x1xf32>
    %202 = vector.extract_strided_slice %136 {offsets = [10, 0], sizes = [1, 128], strides = [1, 1]} : vector<16x128xf32> to vector<1x128xf32>
    %203 = vector.broadcast %201 : vector<2x1xf32> to vector<2x128xf32>
    %204 = vector.broadcast %202 : vector<1x128xf32> to vector<2x128xf32>
    %205 = arith.mulf %203, %204 : vector<2x128xf32>
    %206 = arith.addf %200, %205 : vector<2x128xf32>
    %207 = vector.extract_strided_slice %137 {offsets = [0, 11], sizes = [2, 1], strides = [1, 1]} : vector<2x16xf32> to vector<2x1xf32>
    %208 = vector.extract_strided_slice %136 {offsets = [11, 0], sizes = [1, 128], strides = [1, 1]} : vector<16x128xf32> to vector<1x128xf32>
    %209 = vector.broadcast %207 : vector<2x1xf32> to vector<2x128xf32>
    %210 = vector.broadcast %208 : vector<1x128xf32> to vector<2x128xf32>
    %211 = arith.mulf %209, %210 : vector<2x128xf32>
    %212 = arith.addf %206, %211 : vector<2x128xf32>
    %213 = vector.extract_strided_slice %137 {offsets = [0, 12], sizes = [2, 1], strides = [1, 1]} : vector<2x16xf32> to vector<2x1xf32>
    %214 = vector.extract_strided_slice %136 {offsets = [12, 0], sizes = [1, 128], strides = [1, 1]} : vector<16x128xf32> to vector<1x128xf32>
    %215 = vector.broadcast %213 : vector<2x1xf32> to vector<2x128xf32>
    %216 = vector.broadcast %214 : vector<1x128xf32> to vector<2x128xf32>
    %217 = arith.mulf %215, %216 : vector<2x128xf32>
    %218 = arith.addf %212, %217 : vector<2x128xf32>
    %219 = vector.extract_strided_slice %137 {offsets = [0, 13], sizes = [2, 1], strides = [1, 1]} : vector<2x16xf32> to vector<2x1xf32>
    %220 = vector.extract_strided_slice %136 {offsets = [13, 0], sizes = [1, 128], strides = [1, 1]} : vector<16x128xf32> to vector<1x128xf32>
    %221 = vector.broadcast %219 : vector<2x1xf32> to vector<2x128xf32>
    %222 = vector.broadcast %220 : vector<1x128xf32> to vector<2x128xf32>
    %223 = arith.mulf %221, %222 : vector<2x128xf32>
    %224 = arith.addf %218, %223 : vector<2x128xf32>
    %225 = vector.extract_strided_slice %137 {offsets = [0, 14], sizes = [2, 1], strides = [1, 1]} : vector<2x16xf32> to vector<2x1xf32>
    %226 = vector.extract_strided_slice %136 {offsets = [14, 0], sizes = [1, 128], strides = [1, 1]} : vector<16x128xf32> to vector<1x128xf32>
    %227 = vector.broadcast %225 : vector<2x1xf32> to vector<2x128xf32>
    %228 = vector.broadcast %226 : vector<1x128xf32> to vector<2x128xf32>
    %229 = arith.mulf %227, %228 : vector<2x128xf32>
    %230 = arith.addf %224, %229 : vector<2x128xf32>
    %231 = vector.extract_strided_slice %137 {offsets = [0, 15], sizes = [2, 1], strides = [1, 1]} : vector<2x16xf32> to vector<2x1xf32>
    %232 = vector.extract_strided_slice %136 {offsets = [15, 0], sizes = [1, 128], strides = [1, 1]} : vector<16x128xf32> to vector<1x128xf32>
    %233 = vector.broadcast %231 : vector<2x1xf32> to vector<2x128xf32>
    %234 = vector.broadcast %232 : vector<1x128xf32> to vector<2x128xf32>
    %235 = arith.mulf %233, %234 : vector<2x128xf32>
    %236 = arith.addf %230, %235 : vector<2x128xf32>
    %c0_18 = arith.constant 0 : index
    %c0_19 = arith.constant 0 : index
    %237 = vector.load %arg10[%c0_18, %c0_19] : memref<4x128xf32, #tpu.memory_space<vmem>>, vector<2x128xf32>
    tpu.vector_store %arg10[%c0_18, %c0_19], %236 {strides = array<i32>} : memref<4x128xf32, #tpu.memory_space<vmem>>, vector<2x128xf32>,
    %c2 = arith.constant 2 : index
    %c0_20 = arith.constant 0 : index
    %238 = vector.load %arg10[%c2, %c0_20] : memref<4x128xf32, #tpu.memory_space<vmem>>, vector<2x128xf32>
    tpu.vector_store %arg10[%c2, %c0_20], %118 {strides = array<i32>} : memref<4x128xf32, #tpu.memory_space<vmem>>, vector<2x128xf32>,
    return
  }
  func.func @transform_0(%arg0: i32) -> (i32, i32) {
    %c0_i32 = arith.constant 0 : i32
    %c0_i32_0 = arith.constant 0 : i32
    return %c0_i32, %arg0 : i32, i32
  }
  func.func @transform_1(%arg0: i32) -> (i32, i32) {
    %c0_i32 = arith.constant 0 : i32
    %c0_i32_0 = arith.constant 0 : i32
    %c0_i32_1 = arith.constant 0 : i32
    return %c0_i32, %c0_i32_0 : i32, i32
  }
  func.func @transform_2(%arg0: i32) -> (i32, i32) {
    %c0_i32 = arith.constant 0 : i32
    %c0_i32_0 = arith.constant 0 : i32
    %c0_i32_1 = arith.constant 0 : i32
    return %c0_i32, %c0_i32_0 : i32, i32
  }
  func.func @transform_3(%arg0: i32) -> (i32, i32) {
    %c0_i32 = arith.constant 0 : i32
    %c0_i32_0 = arith.constant 0 : i32
    %c0_i32_1 = arith.constant 0 : i32
    return %c0_i32, %c0_i32_0 : i32, i32
  }
  func.func @transform_4(%arg0: i32) -> (i32, i32) {
    %c0_i32 = arith.constant 0 : i32
    %c0_i32_0 = arith.constant 0 : i32
    %c0_i32_1 = arith.constant 0 : i32
    return %c0_i32, %c0_i32_0 : i32, i32
  }
  func.func @transform_5(%arg0: i32) -> (i32, i32) {
    %c0_i32 = arith.constant 0 : i32
    %c0_i32_0 = arith.constant 0 : i32
    %c0_i32_1 = arith.constant 0 : i32
    return %c0_i32, %c0_i32_0 : i32, i32
  }
  func.func @transform_6(%arg0: i32) -> (i32, i32) {
    %c0_i32 = arith.constant 0 : i32
    %c0_i32_0 = arith.constant 0 : i32
    %c0_i32_1 = arith.constant 0 : i32
    return %c0_i32, %c0_i32_0 : i32, i32
  }
  func.func @transform_7(%arg0: i32) -> (i32, i32) {
    %c0_i32 = arith.constant 0 : i32
    %c0_i32_0 = arith.constant 0 : i32
    %c0_i32_1 = arith.constant 0 : i32
    return %c0_i32, %c0_i32_0 : i32, i32
  }
  func.func @transform_8(%arg0: i32) -> (i32, i32) {
    %c0_i32 = arith.constant 0 : i32
    %c0_i32_0 = arith.constant 0 : i32
    %c0_i32_1 = arith.constant 0 : i32
    return %c0_i32, %c0_i32_0 : i32, i32
  }
  func.func @transform_9(%arg0: i32) -> (i32, i32) {
    %c0_i32 = arith.constant 0 : i32
    %c0_i32_0 = arith.constant 0 : i32
    return %c0_i32, %arg0 : i32, i32
  }
}

</mosaic_0001>

<llo_original>
// kernel: tpu_custom_call.1
$region0: #{tpu_custom_call.1}
  #allocation0 [shape = 'u32[]', space=smem, size = 0x4, offset = 0x4, fixed_abs, tag = 'smem constant byte address 0x4 - core index']
  #allocation1 [shape = 'u32[144,128]{1,0:T(1,128)}', space=vmem, size = 0x12000, scoped, tag = 'internal scratch']
  %s0 = inlined_call_operand.vmem [shape: f32[2,256], index: 0, kind: input, shape index: {}]
  %s1 = inlined_call_operand.vmem [shape: f32[16,2], index: 1, kind: input, shape index: {}]
  %s2 = inlined_call_operand.vmem [shape: f32[16,1], index: 2, kind: input, shape index: {}]
  %s3 = inlined_call_operand.vmem [shape: f32[2,16], index: 3, kind: input, shape index: {}]
  %s4 = inlined_call_operand.vmem [shape: f32[2,1], index: 4, kind: input, shape index: {}]
  %s5 = inlined_call_operand.vmem [shape: f32[16,2], index: 5, kind: input, shape index: {}]
  %s6 = inlined_call_operand.vmem [shape: f32[16,1], index: 6, kind: input, shape index: {}]
  %s7 = inlined_call_operand.vmem [shape: f32[2,16], index: 7, kind: input, shape index: {}]
  %s8 = inlined_call_operand.vmem [shape: f32[2,1], index: 8, kind: input, shape index: {}]
  %s9 = inlined_call_operand.hbm [shape: f32[4,256], index: 9, kind: output, shape index: {}]
  %s10 = sld [smem:[#allocation0]]
  $region69: #{tpu_custom_call.1} parent=0
    _
  %s12 = ssub.s32 1, %s10
  %s13 = scalar_select 0, %s12, %s10
  $region1: #{tpu_custom_call.1} parent=0
    #allocation2 [shape = 'u8[4096]{0}', space=vmem, size = 0x1000, scoped, tag = 'output window, operand 0']
    #allocation3 [shape = 's32[2]{0}', space=sflag, size = 0x8, scoped, tag = 'scoped memory for tpu_custom_call.1']
    %14 = vsyncpa [#allocation3], 0
    %s15 = scalar_lea.sflag [#allocation3], 1
    %16 = vsyncpa %s15, 0
    loop: start=0, step=1, limit=4
    $region2: #{tpu_custom_call.1} parent=1 // loop_pre_header
      _
    $region3: #{tpu_custom_call.1} parent=1 // loop_header
      %s18 = sphi 0, %s22
      %p19 = scmp.ge.s32.totalorder %s18, 4
      %s28 = sphi 0, %s30
      %s31 = sphi 0, %s28
      %s32 = sphi 0, %s31
      %s48 = sphi 0, %s32
      %s52 = sphi 0, %s52
      %s54 = sphi 0, %s52
      %s55 = sphi 0, %s54
      %s69 = sphi 0, %s55
      %s73 = sphi 0, %s73
      %s75 = sphi 0, %s73
      %s76 = sphi 0, %s75
      %s90 = sphi 0, %s76
      %s94 = sphi 0, %s94
      %s96 = sphi 0, %s94
      %s97 = sphi 0, %s96
      %s111 = sphi 0, %s97
      %s115 = sphi 0, %s115
      %s117 = sphi 0, %s115
      %s118 = sphi 0, %s117
      %s132 = sphi 0, %s118
      %s136 = sphi 0, %s136
      %s138 = sphi 0, %s136
      %s139 = sphi 0, %s138
      %s153 = sphi 0, %s139
      %s157 = sphi 0, %s157
      %s159 = sphi 0, %s157
      %s160 = sphi 0, %s159
      %s174 = sphi 0, %s160
      %s178 = sphi 0, %s178
      %s180 = sphi 0, %s178
      %s181 = sphi 0, %s180
      %s195 = sphi 0, %s181
      %s199 = sphi 0, %s199
      %s201 = sphi 0, %s199
      %s202 = sphi 0, %s201
      %s216 = sphi 0, %s202
      %s222 = sphi 0, %s224
      %s225 = sphi 0, %s222
      %s226 = sphi 0, %s225
      %s242 = sphi 0, %s226
    $region4: #{tpu_custom_call.1} parent=1 // loop_header_branch
      %21 = sbr.rel (%p19) target = $region8
    $region5: #{tpu_custom_call.1} parent=1 // loop_body
      %s23 = ssub.s32 %s18, 1
      %s24 = ssub.s32 %s18, 2
      %s25 = sadd.s32 %s18, 1
      %s26 = ssub.s32 %s18, %s25
      %p27 = scmp.eq.s32.totalorder %s26, 0
      %s29 = sadd.s32 %s28, 1
      %s30 = scalar_select %p27, %s28, %s29
      %p33 = pneg %p27
      %p34 = scmp.eq.s32.totalorder %s18, 1
      %p35 = por %p33, %p34
      %p36 = scmp.ne.s32.totalorder %s28, %s31
      %p37 = scmp.eq.s32.totalorder %s18, 0
      %p38 = por %p36, %p37
      %p39 = scmp.ne.s32.totalorder %s28, %s31
      %p40 = scmp.eq.s32.totalorder %s23, 1
      %p41 = por %p39, %p40
      %p42 = scmp.ne.s32.totalorder %s31, %s32
      %p43 = scmp.eq.s32.totalorder %s23, 0
      %p44 = por %p42, %p43
      %p45 = scmp.ne.s32.totalorder %s31, %s32
      %p46 = scmp.eq.s32.totalorder %s24, 1
      %p47 = por %p45, %p46
      %p49 = scmp.ne.s32.totalorder %s32, %s48
      %p50 = scmp.eq.s32.totalorder %s24, 0
      %p51 = por %p49, %p50
      %s53 = sadd.s32 %s52, 1
      %p56 = scmp.eq.s32.totalorder %s18, 1
      %p57 = scmp.ne.s32.totalorder %s52, %s54
      %p58 = scmp.eq.s32.totalorder %s18, 0
      %p59 = por %p57, %p58
      %p60 = scmp.ne.s32.totalorder %s52, %s54
      %p61 = scmp.eq.s32.totalorder %s23, 1
      %p62 = por %p60, %p61
      %p63 = scmp.ne.s32.totalorder %s54, %s55
      %p64 = scmp.eq.s32.totalorder %s23, 0
      %p65 = por %p63, %p64
      %p66 = scmp.ne.s32.totalorder %s54, %s55
      %p67 = scmp.eq.s32.totalorder %s24, 1
      %p68 = por %p66, %p67
      %p70 = scmp.ne.s32.totalorder %s55, %s69
      %p71 = scmp.eq.s32.totalorder %s24, 0
      %p72 = por %p70, %p71
      %s74 = sadd.s32 %s73, 1
      %p77 = scmp.eq.s32.totalorder %s18, 1
      %p78 = scmp.ne.s32.totalorder %s73, %s75
      %p79 = scmp.eq.s32.totalorder %s18, 0
      %p80 = por %p78, %p79
      %p81 = scmp.ne.s32.totalorder %s73, %s75
      %p82 = scmp.eq.s32.totalorder %s23, 1
      %p83 = por %p81, %p82
      %p84 = scmp.ne.s32.totalorder %s75, %s76
      %p85 = scmp.eq.s32.totalorder %s23, 0
      %p86 = por %p84, %p85
      %p87 = scmp.ne.s32.totalorder %s75, %s76
      %p88 = scmp.eq.s32.totalorder %s24, 1
      %p89 = por %p87, %p88
      %p91 = scmp.ne.s32.totalorder %s76, %s90
      %p92 = scmp.eq.s32.totalorder %s24, 0
      %p93 = por %p91, %p92
      %s95 = sadd.s32 %s94, 1
      %p98 = scmp.eq.s32.totalorder %s18, 1
      %p99 = scmp.ne.s32.totalorder %s94, %s96
      %p100 = scmp.eq.s32.totalorder %s18, 0
      %p101 = por %p99, %p100
      %p102 = scmp.ne.s32.totalorder %s94, %s96
      %p103 = scmp.eq.s32.totalorder %s23, 1
      %p104 = por %p102, %p103
      %p105 = scmp.ne.s32.totalorder %s96, %s97
      %p106 = scmp.eq.s32.totalorder %s23, 0
      %p107 = por %p105, %p106
      %p108 = scmp.ne.s32.totalorder %s96, %s97
      %p109 = scmp.eq.s32.totalorder %s24, 1
      %p110 = por %p108, %p109
      %p112 = scmp.ne.s32.totalorder %s97, %s111
      %p113 = scmp.eq.s32.totalorder %s24, 0
      %p114 = por %p112, %p113
      %s116 = sadd.s32 %s115, 1
      %p119 = scmp.eq.s32.totalorder %s18, 1
      %p120 = scmp.ne.s32.totalorder %s115, %s117
      %p121 = scmp.eq.s32.totalorder %s18, 0
      %p122 = por %p120, %p121
      %p123 = scmp.ne.s32.totalorder %s115, %s117
      %p124 = scmp.eq.s32.totalorder %s23, 1
      %p125 = por %p123, %p124
      %p126 = scmp.ne.s32.totalorder %s117, %s118
      %p127 = scmp.eq.s32.totalorder %s23, 0
      %p128 = por %p126, %p127
      %p129 = scmp.ne.s32.totalorder %s117, %s118
      %p130 = scmp.eq.s32.totalorder %s24, 1
      %p131 = por %p129, %p130
      %p133 = scmp.ne.s32.totalorder %s118, %s132
      %p134 = scmp.eq.s32.totalorder %s24, 0
      %p135 = por %p133, %p134
      %s137 = sadd.s32 %s136, 1
      %p140 = scmp.eq.s32.totalorder %s18, 1
      %p141 = scmp.ne.s32.totalorder %s136, %s138
      %p142 = scmp.eq.s32.totalorder %s18, 0
      %p143 = por %p141, %p142
      %p144 = scmp.ne.s32.totalorder %s136, %s138
      %p145 = scmp.eq.s32.totalorder %s23, 1
      %p146 = por %p144, %p145
      %p147 = scmp.ne.s32.totalorder %s138, %s139
      %p148 = scmp.eq.s32.totalorder %s23, 0
      %p149 = por %p147, %p148
      %p150 = scmp.ne.s32.totalorder %s138, %s139
      %p151 = scmp.eq.s32.totalorder %s24, 1
      %p152 = por %p150, %p151
      %p154 = scmp.ne.s32.totalorder %s139, %s153
      %p155 = scmp.eq.s32.totalorder %s24, 0
      %p156 = por %p154, %p155
      %s158 = sadd.s32 %s157, 1
      %p161 = scmp.eq.s32.totalorder %s18, 1
      %p162 = scmp.ne.s32.totalorder %s157, %s159
      %p163 = scmp.eq.s32.totalorder %s18, 0
      %p164 = por %p162, %p163
      %p165 = scmp.ne.s32.totalorder %s157, %s159
      %p166 = scmp.eq.s32.totalorder %s23, 1
      %p167 = por %p165, %p166
      %p168 = scmp.ne.s32.totalorder %s159, %s160
      %p169 = scmp.eq.s32.totalorder %s23, 0
      %p170 = por %p168, %p169
      %p171 = scmp.ne.s32.totalorder %s159, %s160
      %p172 = scmp.eq.s32.totalorder %s24, 1
      %p173 = por %p171, %p172
      %p175 = scmp.ne.s32.totalorder %s160, %s174
      %p176 = scmp.eq.s32.totalorder %s24, 0
      %p177 = por %p175, %p176
      %s179 = sadd.s32 %s178, 1
      %p182 = scmp.eq.s32.totalorder %s18, 1
      %p183 = scmp.ne.s32.totalorder %s178, %s180
      %p184 = scmp.eq.s32.totalorder %s18, 0
      %p185 = por %p183, %p184
      %p186 = scmp.ne.s32.totalorder %s178, %s180
      %p187 = scmp.eq.s32.totalorder %s23, 1
      %p188 = por %p186, %p187
      %p189 = scmp.ne.s32.totalorder %s180, %s181
      %p190 = scmp.eq.s32.totalorder %s23, 0
      %p191 = por %p189, %p190
      %p192 = scmp.ne.s32.totalorder %s180, %s181
      %p193 = scmp.eq.s32.totalorder %s24, 1
      %p194 = por %p192, %p193
      %p196 = scmp.ne.s32.totalorder %s181, %s195
      %p197 = scmp.eq.s32.totalorder %s24, 0
      %p198 = por %p196, %p197
      %s200 = sadd.s32 %s199, 1
      %p203 = scmp.eq.s32.totalorder %s18, 1
      %p204 = scmp.ne.s32.totalorder %s199, %s201
      %p205 = scmp.eq.s32.totalorder %s18, 0
      %p206 = por %p204, %p205
      %p207 = scmp.ne.s32.totalorder %s199, %s201
      %p208 = scmp.eq.s32.totalorder %s23, 1
      %p209 = por %p207, %p208
      %p210 = scmp.ne.s32.totalorder %s201, %s202
      %p211 = scmp.eq.s32.totalorder %s23, 0
      %p212 = por %p210, %p211
      %p213 = scmp.ne.s32.totalorder %s201, %s202
      %p214 = scmp.eq.s32.totalorder %s24, 1
      %p215 = por %p213, %p214
      %p217 = scmp.ne.s32.totalorder %s202, %s216
      %p218 = scmp.eq.s32.totalorder %s24, 0
      %p219 = por %p217, %p218
      %s220 = ssub.s32 %s18, %s25
      %p221 = scmp.eq.s32.totalorder %s220, 0
      %s223 = sadd.s32 %s222, 1
      %s224 = scalar_select %p221, %s222, %s223
      %p227 = pneg %p221
      %p228 = scmp.eq.s32.totalorder %s18, 1
      %p229 = por %p227, %p228
      %p230 = scmp.ne.s32.totalorder %s222, %s225
      %p231 = scmp.eq.s32.totalorder %s18, 0
      %p232 = por %p230, %p231
      %p233 = scmp.ne.s32.totalorder %s222, %s225
      %p234 = scmp.eq.s32.totalorder %s23, 1
      %p235 = por %p233, %p234
      %p236 = scmp.ne.s32.totalorder %s225, %s226
      %p237 = scmp.eq.s32.totalorder %s23, 0
      %p238 = por %p236, %p237
      %p239 = scmp.ne.s32.totalorder %s225, %s226
      %p240 = scmp.eq.s32.totalorder %s24, 1
      %p241 = por %p239, %p240
      %p243 = scmp.ne.s32.totalorder %s226, %s242
      %p244 = scmp.eq.s32.totalorder %s24, 0
      %p245 = por %p243, %p244
      %p246 = scmp.le.s32.totalorder 1, %s18
      %p247 = scmp.lt.s32.totalorder %s18, 3
      %p248 = pnand %p246, %p247
      %p249 = pneg %p248
      // Predicated region
      $region9: #{tpu_custom_call.1} parent=5 // pred_check
        _
      $region10: #{tpu_custom_call.1} parent=5 // pred_check_branch
        %251 = sbr.rel (%p248) target = $region12
      $region11: #{tpu_custom_call.1} parent=5 // pred_region
        %s252 = ssub.s32 %s18, 1
        // Predicated region
        $region13: #{tpu_custom_call.1} parent=11 // pred_check
          %p253 = pneg %p65
        $region14: #{tpu_custom_call.1} parent=11 // pred_check_branch
          %255 = sbr.rel (%p253) target = $region16
        $region15: #{tpu_custom_call.1} parent=11 // pred_region
          _
        $region16: #{tpu_custom_call.1} parent=11 // pred_fallthru
          _
        // Predicated region
        $region17: #{tpu_custom_call.1} parent=11 // pred_check
          %p256 = pneg %p86
        $region18: #{tpu_custom_call.1} parent=11 // pred_check_branch
          %258 = sbr.rel (%p256) target = $region20
        $region19: #{tpu_custom_call.1} parent=11 // pred_region
          _
        $region20: #{tpu_custom_call.1} parent=11 // pred_fallthru
          _
        // Predicated region
        $region21: #{tpu_custom_call.1} parent=11 // pred_check
          %p259 = pneg %p107
        $region22: #{tpu_custom_call.1} parent=11 // pred_check_branch
          %261 = sbr.rel (%p259) target = $region24
        $region23: #{tpu_custom_call.1} parent=11 // pred_region
          _
        $region24: #{tpu_custom_call.1} parent=11 // pred_fallthru
          _
        // Predicated region
        $region25: #{tpu_custom_call.1} parent=11 // pred_check
          %p262 = pneg %p128
        $region26: #{tpu_custom_call.1} parent=11 // pred_check_branch
          %264 = sbr.rel (%p262) target = $region28
        $region27: #{tpu_custom_call.1} parent=11 // pred_region
          _
        $region28: #{tpu_custom_call.1} parent=11 // pred_fallthru
          _
        // Predicated region
        $region29: #{tpu_custom_call.1} parent=11 // pred_check
          %p265 = pneg %p149
        $region30: #{tpu_custom_call.1} parent=11 // pred_check_branch
          %267 = sbr.rel (%p265) target = $region32
        $region31: #{tpu_custom_call.1} parent=11 // pred_region
          _
        $region32: #{tpu_custom_call.1} parent=11 // pred_fallthru
          _
        // Predicated region
        $region33: #{tpu_custom_call.1} parent=11 // pred_check
          %p268 = pneg %p170
        $region34: #{tpu_custom_call.1} parent=11 // pred_check_branch
          %270 = sbr.rel (%p268) target = $region36
        $region35: #{tpu_custom_call.1} parent=11 // pred_region
          _
        $region36: #{tpu_custom_call.1} parent=11 // pred_fallthru
          _
        // Predicated region
        $region37: #{tpu_custom_call.1} parent=11 // pred_check
          %p271 = pneg %p191
        $region38: #{tpu_custom_call.1} parent=11 // pred_check_branch
          %273 = sbr.rel (%p271) target = $region40
        $region39: #{tpu_custom_call.1} parent=11 // pred_region
          _
        $region40: #{tpu_custom_call.1} parent=11 // pred_fallthru
          _
        // Predicated region
        $region41: #{tpu_custom_call.1} parent=11 // pred_check
          %p274 = pneg %p212
        $region42: #{tpu_custom_call.1} parent=11 // pred_check_branch
          %276 = sbr.rel (%p274) target = $region44
        $region43: #{tpu_custom_call.1} parent=11 // pred_region
          _
        $region44: #{tpu_custom_call.1} parent=11 // pred_fallthru
          _
      $region12: #{tpu_custom_call.1} parent=5 // pred_fallthru
        _
      %p277 = scmp.lt.s32.totalorder %s18, 2
      // Predicated region
      $region45: #{tpu_custom_call.1} parent=5 // pred_check
        %p278 = pneg %p277
      $region46: #{tpu_custom_call.1} parent=5 // pred_check_branch
        %280 = sbr.rel (%p278) target = $region48
      $region47: #{tpu_custom_call.1} parent=5 // pred_region
        // Predicated region
        $region49: #{tpu_custom_call.1} parent=47 // pred_check
          %p281 = pneg %p38
        $region50: #{tpu_custom_call.1} parent=47 // pred_check_branch
          %283 = sbr.rel (%p281) target = $region52
        $region51: #{tpu_custom_call.1} parent=47 // pred_region
          %p284 = scmp.lt.s32.totalorder %s18, 1
          %s285 = scalar_select %p284, %s18, 1
          %s286 = smul.addr %s285, 2
          %s287 = scalar_lea.vmem %s0, %s286
        $region52: #{tpu_custom_call.1} parent=47 // pred_fallthru
          _
      $region48: #{tpu_custom_call.1} parent=5 // pred_fallthru
        _
      %p288 = scmp.le.s32.totalorder 1, %s18
      %p289 = scmp.lt.s32.totalorder %s18, 3
      %p290 = pnand %p288, %p289
      %p291 = pneg %p290
      // Predicated region
      $region53: #{tpu_custom_call.1} parent=5 // pred_check
        _
      $region54: #{tpu_custom_call.1} parent=5 // pred_check_branch
        %293 = sbr.rel (%p290) target = $region56
      $region55: #{tpu_custom_call.1} parent=5 // pred_region
        %s294 = ssub.s32 %s18, 1
        %p295 = scmp.lt.s32.totalorder %s23, 1
        %s296 = scalar_select %p295, %s23, 1
        %s297 = smul.addr %s296, 2
        %s298 = scalar_lea.vmem %s0, %s297
        %p299 = pneg %p44
        %p300 = pneg %p41
        %p301 = pneg %p65
        %p302 = pneg %p62
        %p303 = pneg %p86
        %p304 = pneg %p83
        %p305 = pneg %p107
        %p306 = pneg %p104
        %p307 = pneg %p128
        %p308 = pneg %p125
        %p309 = pneg %p149
        %p310 = pneg %p146
        %p311 = pneg %p170
        %p312 = pneg %p167
        %p313 = pneg %p191
        %p314 = pneg %p188
        %p315 = pneg %p212
        %p316 = pneg %p209
        %p317 = pneg %p238
        %p318 = pneg %p235
        %s319 = sand.u32 %s225, 1
        %s320 = scalar_lea.sflag [#allocation3], %s319
        %s321 = sand.u32 %s225, 1
        %s322 = smul.addr %s321, 4
        %s323 = scalar_lea.vmem [#allocation2], %s322
        %p324 = scmp.lt.s32.totalorder %s23, 1
        %s325 = scalar_select %p324, %s23, 1
        %s326 = smul.addr %s325, 2
        %s327 = scalar_lea.vmem %s0, %s326
        %v328 = vld [vmem:[%s327] sm:$0x3]
        %v329 = vld [vmem:[%s1] sm:$0xff]
        %v330 = vld [vmem:[%s1 + $0x8] sm:$0xff]
        %v331 = vld [vmem:[%s2] sm:$0xff]
        %v332 = vld [vmem:[%s2 + $0x8] sm:$0xff]
        %334 = vset.pattern.permute.xlu0 0
        %335 = vperm.xlu0 %334, %v331
        %v336 = vpop.permute.xlu0 %335
        %339 = vset.pattern.permute.xlu0 0
        %340 = vperm.xlu0 %339, %v332
        %v341 = vpop.permute.xlu0 %340
        %344 = vset.pattern.permute.xlu0 0
        %345 = vperm.xlu0 %344, %v329
        %v346 = vpop.permute.xlu0 %345
        %349 = vset.pattern.permute.xlu0 0
        %350 = vperm.xlu0 %349, %v330
        %v351 = vpop.permute.xlu0 %350
        %v353 = vlaneseq
        %v354 = vshrl.u32 %v353, 7
        %v355 = vsub.s32 0, %v354
        %v356 = vrot.slane %v328, %v355
        %v357 = vmul.f32 %v346, %v356
        %v358 = vmul.f32 %v351, %v356
        %v359 = vadd.f32 %v336, %v357
        %v360 = vadd.f32 %v341, %v358
        %361 = vset.pattern.permute.xlu0 1
        %362 = vperm.xlu0 %361, %v329
        %v363 = vpop.permute.xlu0 %362
        %365 = vset.pattern.permute.xlu0 1
        %366 = vperm.xlu0 %365, %v330
        %v367 = vpop.permute.xlu0 %366
        %v369 = vlaneseq
        %v370 = vshrl.u32 %v369, 7
        %v371 = vsub.s32 1, %v370
        %v372 = vrot.slane %v328, %v371
        %v373 = vmul.f32 %v363, %v372
        %v374 = vmul.f32 %v367, %v372
        %v375 = vadd.f32 %v359, %v373
        %v376 = vadd.f32 %v360, %v374
        %v377 = vmax.f32 %v375, 0.0
        %v378 = vmax.f32 %v376, 0.0
        %v379 = vld [vmem:[%s3] sm:$0x3]
        %v380 = vld [vmem:[%s4] sm:$0x3]
        %382 = vset.pattern.permute.xlu0 0
        %383 = vperm.xlu0 %382, %v380
        %v384 = vpop.permute.xlu0 %383
        %387 = vset.pattern.permute.xlu0 0
        %388 = vperm.xlu0 %387, %v379
        %v389 = vpop.permute.xlu0 %388
        %v391 = vlaneseq
        %v392 = vshrl.u32 %v391, 7
        %v393 = vsub.s32 0, %v392
        %v394 = vrot.slane %v377, %v393
        %v395 = vmul.f32 %v389, %v394
        %v396 = vadd.f32 %v384, %v395
        %397 = vset.pattern.permute.xlu0 1
        %398 = vperm.xlu0 %397, %v379
        %v399 = vpop.permute.xlu0 %398
        %v401 = vlaneseq
        %v402 = vshrl.u32 %v401, 7
        %v403 = vsub.s32 1, %v402
        %v404 = vrot.slane %v377, %v403
        %v405 = vmul.f32 %v399, %v404
        %v406 = vadd.f32 %v396, %v405
        %407 = vset.pattern.permute.xlu0 2
        %408 = vperm.xlu0 %407, %v379
        %v409 = vpop.permute.xlu0 %408
        %v411 = vlaneseq
        %v412 = vshrl.u32 %v411, 7
        %v413 = vsub.s32 2, %v412
        %v414 = vrot.slane %v377, %v413
        %v415 = vmul.f32 %v409, %v414
        %v416 = vadd.f32 %v406, %v415
        %417 = vset.pattern.permute.xlu0 3
        %418 = vperm.xlu0 %417, %v379
        %v419 = vpop.permute.xlu0 %418
        %v421 = vlaneseq
        %v422 = vshrl.u32 %v421, 7
        %v423 = vsub.s32 3, %v422
        %v424 = vrot.slane %v377, %v423
        %v425 = vmul.f32 %v419, %v424
        %v426 = vadd.f32 %v416, %v425
        %427 = vset.pattern.permute.xlu0 4
        %428 = vperm.xlu0 %427, %v379
        %v429 = vpop.permute.xlu0 %428
        %v431 = vlaneseq
        %v432 = vshrl.u32 %v431, 7
        %v433 = vsub.s32 4, %v432
        %v434 = vrot.slane %v377, %v433
        %v435 = vmul.f32 %v429, %v434
        %v436 = vadd.f32 %v426, %v435
        %437 = vset.pattern.permute.xlu0 5
        %438 = vperm.xlu0 %437, %v379
        %v439 = vpop.permute.xlu0 %438
        %v441 = vlaneseq
        %v442 = vshrl.u32 %v441, 7
        %v443 = vsub.s32 5, %v442
        %v444 = vrot.slane %v377, %v443
        %v445 = vmul.f32 %v439, %v444
        %v446 = vadd.f32 %v436, %v445
        %447 = vset.pattern.permute.xlu0 6
        %448 = vperm.xlu0 %447, %v379
        %v449 = vpop.permute.xlu0 %448
        %v451 = vlaneseq
        %v452 = vshrl.u32 %v451, 7
        %v453 = vsub.s32 6, %v452
        %v454 = vrot.slane %v377, %v453
        %v455 = vmul.f32 %v449, %v454
        %v456 = vadd.f32 %v446, %v455
        %457 = vset.pattern.permute.xlu0 7
        %458 = vperm.xlu0 %457, %v379
        %v459 = vpop.permute.xlu0 %458
        %v461 = vlaneseq
        %v462 = vshrl.u32 %v461, 7
        %v463 = vsub.s32 7, %v462
        %v464 = vrot.slane %v377, %v463
        %v465 = vmul.f32 %v459, %v464
        %v466 = vadd.f32 %v456, %v465
        %467 = vset.pattern.permute.xlu0 8
        %468 = vperm.xlu0 %467, %v379
        %v469 = vpop.permute.xlu0 %468
        %v471 = vlaneseq
        %v472 = vshrl.u32 %v471, 7
        %v473 = vsub.s32 0, %v472
        %v474 = vrot.slane %v378, %v473
        %v475 = vmul.f32 %v469, %v474
        %v476 = vadd.f32 %v466, %v475
        %477 = vset.pattern.permute.xlu0 9
        %478 = vperm.xlu0 %477, %v379
        %v479 = vpop.permute.xlu0 %478
        %v481 = vlaneseq
        %v482 = vshrl.u32 %v481, 7
        %v483 = vsub.s32 1, %v482
        %v484 = vrot.slane %v378, %v483
        %v485 = vmul.f32 %v479, %v484
        %v486 = vadd.f32 %v476, %v485
        %487 = vset.pattern.permute.xlu0 10
        %488 = vperm.xlu0 %487, %v379
        %v489 = vpop.permute.xlu0 %488
        %v491 = vlaneseq
        %v492 = vshrl.u32 %v491, 7
        %v493 = vsub.s32 2, %v492
        %v494 = vrot.slane %v378, %v493
        %v495 = vmul.f32 %v489, %v494
        %v496 = vadd.f32 %v486, %v495
        %497 = vset.pattern.permute.xlu0 11
        %498 = vperm.xlu0 %497, %v379
        %v499 = vpop.permute.xlu0 %498
        %v501 = vlaneseq
        %v502 = vshrl.u32 %v501, 7
        %v503 = vsub.s32 3, %v502
        %v504 = vrot.slane %v378, %v503
        %v505 = vmul.f32 %v499, %v504
        %v506 = vadd.f32 %v496, %v505
        %507 = vset.pattern.permute.xlu0 12
        %508 = vperm.xlu0 %507, %v379
        %v509 = vpop.permute.xlu0 %508
        %v511 = vlaneseq
        %v512 = vshrl.u32 %v511, 7
        %v513 = vsub.s32 4, %v512
        %v514 = vrot.slane %v378, %v513
        %v515 = vmul.f32 %v509, %v514
        %v516 = vadd.f32 %v506, %v515
        %517 = vset.pattern.permute.xlu0 13
        %518 = vperm.xlu0 %517, %v379
        %v519 = vpop.permute.xlu0 %518
        %v521 = vlaneseq
        %v522 = vshrl.u32 %v521, 7
        %v523 = vsub.s32 5, %v522
        %v524 = vrot.slane %v378, %v523
        %v525 = vmul.f32 %v519, %v524
        %v526 = vadd.f32 %v516, %v525
        %527 = vset.pattern.permute.xlu0 14
        %528 = vperm.xlu0 %527, %v379
        %v529 = vpop.permute.xlu0 %528
        %v531 = vlaneseq
        %v532 = vshrl.u32 %v531, 7
        %v533 = vsub.s32 6, %v532
        %v534 = vrot.slane %v378, %v533
        %v535 = vmul.f32 %v529, %v534
        %v536 = vadd.f32 %v526, %v535
        %537 = vset.pattern.permute.xlu0 15
        %538 = vperm.xlu0 %537, %v379
        %v539 = vpop.permute.xlu0 %538
        %v541 = vlaneseq
        %v542 = vshrl.u32 %v541, 7
        %v543 = vsub.s32 7, %v542
        %v544 = vrot.slane %v378, %v543
        %v545 = vmul.f32 %v539, %v544
        %v546 = vadd.f32 %v536, %v545
        %v547 = vld [vmem:[%s5] sm:$0xff]
        %v548 = vld [vmem:[%s5 + $0x8] sm:$0xff]
        %v549 = vld [vmem:[%s6] sm:$0xff]
        %v550 = vld [vmem:[%s6 + $0x8] sm:$0xff]
        %552 = vset.pattern.permute.xlu0 0
        %553 = vperm.xlu0 %552, %v549
        %v554 = vpop.permute.xlu0 %553
        %557 = vset.pattern.permute.xlu0 0
        %558 = vperm.xlu0 %557, %v550
        %v559 = vpop.permute.xlu0 %558
        %562 = vset.pattern.permute.xlu0 0
        %563 = vperm.xlu0 %562, %v547
        %v564 = vpop.permute.xlu0 %563
        %567 = vset.pattern.permute.xlu0 0
        %568 = vperm.xlu0 %567, %v548
        %v569 = vpop.permute.xlu0 %568
        %v571 = vlaneseq
        %v572 = vshrl.u32 %v571, 7
        %v573 = vsub.s32 0, %v572
        %v574 = vrot.slane %v546, %v573
        %v575 = vmul.f32 %v564, %v574
        %v576 = vmul.f32 %v569, %v574
        %v577 = vadd.f32 %v554, %v575
        %v578 = vadd.f32 %v559, %v576
        %579 = vset.pattern.permute.xlu0 1
        %580 = vperm.xlu0 %579, %v547
        %v581 = vpop.permute.xlu0 %580
        %583 = vset.pattern.permute.xlu0 1
        %584 = vperm.xlu0 %583, %v548
        %v585 = vpop.permute.xlu0 %584
        %v587 = vlaneseq
        %v588 = vshrl.u32 %v587, 7
        %v589 = vsub.s32 1, %v588
        %v590 = vrot.slane %v546, %v589
        %v591 = vmul.f32 %v581, %v590
        %v592 = vmul.f32 %v585, %v590
        %v593 = vadd.f32 %v577, %v591
        %v594 = vadd.f32 %v578, %v592
        %v595 = vmax.f32 %v593, 0.0
        %v596 = vmax.f32 %v594, 0.0
        %v597 = vld [vmem:[%s7] sm:$0x3]
        %v598 = vld [vmem:[%s8] sm:$0x3]
        %600 = vset.pattern.permute.xlu0 0
        %601 = vperm.xlu0 %600, %v598
        %v602 = vpop.permute.xlu0 %601
        %605 = vset.pattern.permute.xlu0 0
        %606 = vperm.xlu0 %605, %v597
        %v607 = vpop.permute.xlu0 %606
        %v609 = vlaneseq
        %v610 = vshrl.u32 %v609, 7
        %v611 = vsub.s32 0, %v610
        %v612 = vrot.slane %v595, %v611
        %v613 = vmul.f32 %v607, %v612
        %v614 = vadd.f32 %v602, %v613
        %615 = vset.pattern.permute.xlu0 1
        %616 = vperm.xlu0 %615, %v597
        %v617 = vpop.permute.xlu0 %616
        %v619 = vlaneseq
        %v620 = vshrl.u32 %v619, 7
        %v621 = vsub.s32 1, %v620
        %v622 = vrot.slane %v595, %v621
        %v623 = vmul.f32 %v617, %v622
        %v624 = vadd.f32 %v614, %v623
        %625 = vset.pattern.permute.xlu0 2
        %626 = vperm.xlu0 %625, %v597
        %v627 = vpop.permute.xlu0 %626
        %v629 = vlaneseq
        %v630 = vshrl.u32 %v629, 7
        %v631 = vsub.s32 2, %v630
        %v632 = vrot.slane %v595, %v631
        %v633 = vmul.f32 %v627, %v632
        %v634 = vadd.f32 %v624, %v633
        %635 = vset.pattern.permute.xlu0 3
        %636 = vperm.xlu0 %635, %v597
        %v637 = vpop.permute.xlu0 %636
        %v639 = vlaneseq
        %v640 = vshrl.u32 %v639, 7
        %v641 = vsub.s32 3, %v640
        %v642 = vrot.slane %v595, %v641
        %v643 = vmul.f32 %v637, %v642
        %v644 = vadd.f32 %v634, %v643
        %645 = vset.pattern.permute.xlu0 4
        %646 = vperm.xlu0 %645, %v597
        %v647 = vpop.permute.xlu0 %646
        %v649 = vlaneseq
        %v650 = vshrl.u32 %v649, 7
        %v651 = vsub.s32 4, %v650
        %v652 = vrot.slane %v595, %v651
        %v653 = vmul.f32 %v647, %v652
        %v654 = vadd.f32 %v644, %v653
        %655 = vset.pattern.permute.xlu0 5
        %656 = vperm.xlu0 %655, %v597
        %v657 = vpop.permute.xlu0 %656
        %v659 = vlaneseq
        %v660 = vshrl.u32 %v659, 7
        %v661 = vsub.s32 5, %v660
        %v662 = vrot.slane %v595, %v661
        %v663 = vmul.f32 %v657, %v662
        %v664 = vadd.f32 %v654, %v663
        %665 = vset.pattern.permute.xlu0 6
        %666 = vperm.xlu0 %665, %v597
        %v667 = vpop.permute.xlu0 %666
        %v669 = vlaneseq
        %v670 = vshrl.u32 %v669, 7
        %v671 = vsub.s32 6, %v670
        %v672 = vrot.slane %v595, %v671
        %v673 = vmul.f32 %v667, %v672
        %v674 = vadd.f32 %v664, %v673
        %675 = vset.pattern.permute.xlu0 7
        %676 = vperm.xlu0 %675, %v597
        %v677 = vpop.permute.xlu0 %676
        %v679 = vlaneseq
        %v680 = vshrl.u32 %v679, 7
        %v681 = vsub.s32 7, %v680
        %v682 = vrot.slane %v595, %v681
        %v683 = vmul.f32 %v677, %v682
        %v684 = vadd.f32 %v674, %v683
        %685 = vset.pattern.permute.xlu0 8
        %686 = vperm.xlu0 %685, %v597
        %v687 = vpop.permute.xlu0 %686
        %v689 = vlaneseq
        %v690 = vshrl.u32 %v689, 7
        %v691 = vsub.s32 0, %v690
        %v692 = vrot.slane %v596, %v691
        %v693 = vmul.f32 %v687, %v692
        %v694 = vadd.f32 %v684, %v693
        %695 = vset.pattern.permute.xlu0 9
        %696 = vperm.xlu0 %695, %v597
        %v697 = vpop.permute.xlu0 %696
        %v699 = vlaneseq
        %v700 = vshrl.u32 %v699, 7
        %v701 = vsub.s32 1, %v700
        %v702 = vrot.slane %v596, %v701
        %v703 = vmul.f32 %v697, %v702
        %v704 = vadd.f32 %v694, %v703
        %705 = vset.pattern.permute.xlu0 10
        %706 = vperm.xlu0 %705, %v597
        %v707 = vpop.permute.xlu0 %706
        %v709 = vlaneseq
        %v710 = vshrl.u32 %v709, 7
        %v711 = vsub.s32 2, %v710
        %v712 = vrot.slane %v596, %v711
        %v713 = vmul.f32 %v707, %v712
        %v714 = vadd.f32 %v704, %v713
        %715 = vset.pattern.permute.xlu0 11
        %716 = vperm.xlu0 %715, %v597
        %v717 = vpop.permute.xlu0 %716
        %v719 = vlaneseq
        %v720 = vshrl.u32 %v719, 7
        %v721 = vsub.s32 3, %v720
        %v722 = vrot.slane %v596, %v721
        %v723 = vmul.f32 %v717, %v722
        %v724 = vadd.f32 %v714, %v723
        %725 = vset.pattern.permute.xlu0 12
        %726 = vperm.xlu0 %725, %v597
        %v727 = vpop.permute.xlu0 %726
        %v729 = vlaneseq
        %v730 = vshrl.u32 %v729, 7
        %v731 = vsub.s32 4, %v730
        %v732 = vrot.slane %v596, %v731
        %v733 = vmul.f32 %v727, %v732
        %v734 = vadd.f32 %v724, %v733
        %735 = vset.pattern.permute.xlu0 13
        %736 = vperm.xlu0 %735, %v597
        %v737 = vpop.permute.xlu0 %736
        %v739 = vlaneseq
        %v740 = vshrl.u32 %v739, 7
        %v741 = vsub.s32 5, %v740
        %v742 = vrot.slane %v596, %v741
        %v743 = vmul.f32 %v737, %v742
        %v744 = vadd.f32 %v734, %v743
        %745 = vset.pattern.permute.xlu0 14
        %746 = vperm.xlu0 %745, %v597
        %v747 = vpop.permute.xlu0 %746
        %v749 = vlaneseq
        %v750 = vshrl.u32 %v749, 7
        %v751 = vsub.s32 6, %v750
        %v752 = vrot.slane %v596, %v751
        %v753 = vmul.f32 %v747, %v752
        %v754 = vadd.f32 %v744, %v753
        %755 = vset.pattern.permute.xlu0 15
        %756 = vperm.xlu0 %755, %v597
        %v757 = vpop.permute.xlu0 %756
        %v759 = vlaneseq
        %v760 = vshrl.u32 %v759, 7
        %v761 = vsub.s32 7, %v760
        %v762 = vrot.slane %v596, %v761
        %v763 = vmul.f32 %v757, %v762
        %v764 = vadd.f32 %v754, %v763
        %765 = vst [vmem:[%s323] sm:$0x3] %v764
        %766 = vst [vmem:[%s323 + $0x2] sm:$0x3] %v546
        %s767 = sand.u32 %s225, 1
        %s768 = scalar_lea.sflag [#allocation3], %s767
        %s769 = sand.u32 %s225, 1
        %s770 = smul.addr %s769, 4
        %s771 = scalar_lea.vmem [#allocation2], %s770
        // Predicated region
        $region57: #{tpu_custom_call.1} parent=55 // pred_check
          %p772 = pneg %p235
        $region58: #{tpu_custom_call.1} parent=55 // pred_check_branch
          %774 = sbr.rel (%p772) target = $region60
        $region59: #{tpu_custom_call.1} parent=55 // pred_region
          %s776 = ssub.s32 64, 64
          %777 = vsyncadd %s768, %s776
          %s778 = smul.addr %s23, 64
          %s779 = scalar_lea.hbm %s9, %s778
          %s781 = sshll.u32 %s771, 4
          %s782 = int_to_ptr.vmem [resolvable:$true] %s781
          %784 = dma.vmem_to_hbm [thread:$0]  %s782, 64, %s779, %s768
        $region60: #{tpu_custom_call.1} parent=55 // pred_fallthru
          _
      $region56: #{tpu_custom_call.1} parent=5 // pred_fallthru
        _
      %p785 = scmp.le.s32.totalorder 2, %s18
      // Predicated region
      $region61: #{tpu_custom_call.1} parent=5 // pred_check
        %p786 = pneg %p785
      $region62: #{tpu_custom_call.1} parent=5 // pred_check_branch
        %788 = sbr.rel (%p786) target = $region64
      $region63: #{tpu_custom_call.1} parent=5 // pred_region
        %s789 = ssub.s32 %s18, 2
        // Predicated region
        $region65: #{tpu_custom_call.1} parent=63 // pred_check
          %p790 = pneg %p241
        $region66: #{tpu_custom_call.1} parent=63 // pred_check_branch
          %792 = sbr.rel (%p790) target = $region68
        $region67: #{tpu_custom_call.1} parent=63 // pred_region
          %s793 = sand.u32 %s226, 1
          %s794 = scalar_lea.sflag [#allocation3], %s793
          %s795 = sand.u32 %s226, 1
          %s796 = smul.addr %s795, 4
          %s797 = scalar_lea.vmem [#allocation2], %s796
          %798 = dma.done %s794, 64
        $region68: #{tpu_custom_call.1} parent=63 // pred_fallthru
          _
      $region64: #{tpu_custom_call.1} parent=5 // pred_fallthru
        _
    $region6: #{tpu_custom_call.1} parent=1 // loop_footer
      %s22 = sadd.s32 1, %s18
    $region7: #{tpu_custom_call.1} parent=1 // loop_footer_branch
      %17 = sbr.rel target = $region3
    $region8: #{tpu_custom_call.1} parent=1 // loop_exit
      _
    %799 = vsyncpa [#allocation3], 1
    %s800 = scalar_lea.sflag [#allocation3], 1
    %801 = vsyncpa %s800, 1

</llo_original>
